<compile_context>
chip_gen: v7x
topology: tpu7x:2x2x1
jax: 0.10.0
libtpu: 0.0.40
codegen_flags: <defaults>
</compile_context>

<pallas_src>
import functools
import math

import jax
import jax.numpy as jnp
import numpy as np
from jax import lax
from jax.experimental import pallas as pl
from jax.experimental.pallas import tpu as pltpu


def _round_up(x, m):
    return ((x + m - 1) // m) * m


def _device_vmem_and_cores():
    """(physical VMEM bytes per TensorCore, TensorCores per chip) — best effort."""
    try:
        kind = jax.devices()[0].device_kind.lower()
    except Exception:  # pragma: no cover
        kind = ""
    if "v5" in kind or "v6" in kind:
        return 128 << 20, 1          # v5e / v6e: 128 MiB VMEM, 1 TC
    if "v7" in kind or "7x" in kind:
        return 64 << 20, 2           # v7x: 64 MiB per TC, 2 TCs per chip
    return 64 << 20, 1               # unknown / older: conservative


def _pick_batch_tile(b, slab_bytes, small_bytes, vmem_budget, num_cores):
    """Largest batch tile whose double-buffered I/O + ~3 live temp slabs fit
    the budget, preferring >= 2 grid steps per TensorCore so the pipeline can
    hide HBM traffic.  Returns (batch_tile, single_buffer_slabs)."""
    # per batch element: z in (x2 buffers) + out (x2 buffers) + ~3 live temps,
    # plus the small (marginals + norm) streams double-buffered.
    per_elem = 7 * slab_bytes + 4 * small_bytes
    max_bt = max(1, int(vmem_budget // per_elem))
    divs = [d for d in range(1, b + 1) if b % d == 0 and d <= max_bt]
    if not divs:
        return 1, True               # even bt=1 over budget: single-buffer slabs
    for min_steps in (2 * num_cores, num_cores, 1):
        cands = [d for d in divs if b // d >= min_steps]
        if cands:
            return max(cands), False
    return 1, True                   # unreachable


def _sinkhorn_kernel(z_ref, log_mu_ref, log_nu_ref, norm_ref, out_ref, *,
                     num_iter, row_axis, col_axis, unroll, exp_dtype):
    """Log-domain Sinkhorn on one (Bt, S, L) slab.

    z_ref      : VMEM (Bt, S, L)  padded + masked scores; the layout may be the
                 transpose of the original (row, col) problem.
    log_mu_ref : VMEM row-marginal (size-1 along col_axis)
    log_nu_ref : VMEM col-marginal (size-1 along row_axis)
    norm_ref   : VMEM (Bt, 1, 1)  per-batch normalizer
    out_ref    : VMEM (Bt, S, L)
    row_axis / col_axis : kernel axes carrying the ORIGINAL rows / columns.
    """
    z = z_ref[...]
    log_mu = log_mu_ref[...]
    log_nu = log_nu_ref[...]
    f32 = jnp.float32
    bf16_exp = jnp.dtype(exp_dtype) != jnp.dtype(jnp.float32)

    def lse(t, axis):
        m = jnp.max(t, axis=axis, keepdims=True)          # f32 (sentinel-safe)
        shifted = t - m                                    # <= 0, f32
        if bf16_exp:
            # exp in bf16 rides the bf16 EUP on v6e/v7x; accumulation stays f32.
            e = jnp.exp(shifted.astype(exp_dtype)).astype(f32)
        else:
            e = jnp.exp(shifted)
        return m + jnp.log(jnp.sum(e, axis=axis, keepdims=True))

    def body(_, carry):
        u, v = carry
        u = log_mu - lse(z + v, col_axis)                  # row potential first
        v = log_nu - lse(z + u, row_axis)
        return u, v

    u0 = jnp.zeros(log_mu.shape, f32)
    v0 = jnp.zeros(log_nu.shape, f32)
    u, v = lax.fori_loop(0, num_iter, body, (u0, v0), unroll=unroll)

    # Fused epilogue: single full-width lane-dense store, no per-slice loop.
    out_ref[...] = z + u + v - norm_ref[...]


def learnable_log_optimal_transport(scores, alpha, row_masks=None,
                                    col_masks=None, *, num_iter=10,
                                    inf=1.0e12, batch_tile=None,
                                    exp_dtype=jnp.float32):
    """JAX/Pallas equivalent of LearnableLogOptimalTransport.forward."""
    inf = float(inf)
    assert math.isfinite(inf), (
        "`inf` must be a finite sentinel (e.g. 1e12); the stabilized in-kernel "
        "log-sum-exp does not guard true infinities.")
    scores = scores.astype(jnp.float32)
    b, m, n = scores.shape
    mp1, np1 = m + 1, n + 1

    if row_masks is None:
        row_masks = jnp.ones((b, m), dtype=bool)
    if col_masks is None:
        col_masks = jnp.ones((b, n), dtype=bool)
    row_masks = row_masks.astype(bool)
    col_masks = col_masks.astype(bool)

    neg = jnp.float32(-inf)
    pos = jnp.float32(inf)
    alpha = jnp.asarray(alpha, jnp.float32)

    nvr = jnp.sum(row_masks.astype(jnp.float32), axis=1)           # (B,)
    nvc = jnp.sum(col_masks.astype(jnp.float32), axis=1)           # (B,)
    norm = -jnp.log(nvr + nvc)                                     # (B,)

    ones_b1 = jnp.ones((b, 1), dtype=bool)
    row_valid1 = jnp.concatenate([row_masks, ones_b1], axis=1)     # (B, M+1)
    col_valid1 = jnp.concatenate([col_masks, ones_b1], axis=1)     # (B, N+1)

    # Marginals over the real (M+1)/(N+1) extents (reference semantics:
    # masked rows -> +inf in log_mu, masked cols -> -inf in log_nu).
    log_mu1 = jnp.concatenate(
        [jnp.broadcast_to(norm[:, None], (b, m)), (jnp.log(nvc) + norm)[:, None]],
        axis=1)
    log_mu1 = jnp.where(row_valid1, log_mu1, pos)
    log_nu1 = jnp.concatenate(
        [jnp.broadcast_to(norm[:, None], (b, n)), (jnp.log(nvr) + norm)[:, None]],
        axis=1)
    log_nu1 = jnp.where(col_valid1, log_nu1, neg)

    # z over the real (M+1, N+1) extent: alpha on the slack row/col, -inf on
    # masked entries (XLA fuses pad + both selects into one pass).
    z1 = jnp.pad(scores, ((0, 0), (0, 1), (0, 1)))
    slack = (jnp.arange(mp1)[:, None] == m) | (jnp.arange(np1)[None, :] == n)
    z1 = jnp.where(slack[None], alpha, z1)
    invalid = ~(row_valid1[:, :, None] & col_valid1[:, None, :])
    z1 = jnp.where(invalid, neg, z1)

    # Orientation: smaller of (M+1, N+1) on sublanes (x8), larger on lanes
    # (x128) to minimize padded slab area, i.e. exp/VALU/HBM work.
    transposed = mp1 > np1
    if transposed:
        z1 = jnp.swapaxes(z1, 1, 2)                                # (B, N+1, M+1)
        sub_len, lane_len = np1, mp1
        sub_marg, lane_marg = log_nu1, log_mu1
    else:
        sub_len, lane_len = mp1, np1
        sub_marg, lane_marg = log_mu1, log_nu1

    s_pad = _round_up(sub_len, 8)
    l_pad = _round_up(lane_len, 128)
    # Layout padding behaves like fully-masked rows/cols: z = -inf and
    # marginal = -inf, so it contributes exp(-inf) = 0 to every LSE.
    z = jnp.pad(z1, ((0, 0), (0, s_pad - sub_len), (0, l_pad - lane_len)),
                constant_values=-inf)
    sub_marg_p = jnp.pad(sub_marg, ((0, 0), (0, s_pad - sub_len)),
                         constant_values=-inf).reshape(b, s_pad, 1)
    lane_marg_p = jnp.pad(lane_marg, ((0, 0), (0, l_pad - lane_len)),
                          constant_values=-inf).reshape(b, 1, l_pad)

    if transposed:
        log_mu_arr, log_nu_arr = lane_marg_p, sub_marg_p
        row_axis, col_axis = 2, 1
    else:
        log_mu_arr, log_nu_arr = sub_marg_p, lane_marg_p
        row_axis, col_axis = 1, 2

    norm3 = norm.reshape(b, 1, 1).astype(jnp.float32)

    # Generation-aware VMEM budgeting / batch tiling.
    phys_vmem, num_cores = _device_vmem_and_cores()
    vmem_limit = (96 << 20) if phys_vmem >= (128 << 20) else (48 << 20)
    slab_bytes = 4 * s_pad * l_pad
    small_bytes = 4 * (s_pad + l_pad + 1)
    single_buf = False
    if batch_tile is None:
        batch_tile, single_buf = _pick_batch_tile(
            b, slab_bytes, small_bytes, int(vmem_limit * 0.6), num_cores)
    assert b % batch_tile == 0, "batch_tile must divide the batch size"
    grid = (b // batch_tile,)

    # Full unroll only when the slab is small (few vregs per op); the u->v
    # carry is serial, so big slabs gain nothing from a 10x unroll.
    unroll = True if batch_tile * slab_bytes <= (256 << 10) else 2

    slab_kwargs = {}
    if single_buf:
        # Huge M,N on v7x: trade one exposed DMA per step for fitting VMEM.
        slab_kwargs = dict(pipeline_mode=pl.Buffered(1))

    def _spec(arr):
        return pl.BlockSpec((batch_tile,) + tuple(arr.shape[1:]),
                            lambda i: (i, 0, 0))

    kernel = functools.partial(_sinkhorn_kernel, num_iter=num_iter,
                               row_axis=row_axis, col_axis=col_axis,
                               unroll=unroll, exp_dtype=exp_dtype)

    out_full = pl.pallas_call(
        kernel,
        out_shape=jax.ShapeDtypeStruct((b, s_pad, l_pad), jnp.float32),
        grid=grid,
        in_specs=[
            pl.BlockSpec((batch_tile, s_pad, l_pad), lambda i: (i, 0, 0),
                         **slab_kwargs),                    # z
            _spec(log_mu_arr),                              # row marginal
            _spec(log_nu_arr),                              # col marginal
            _spec(norm3),                                   # per-batch norm
        ],
        out_specs=pl.BlockSpec((batch_tile, s_pad, l_pad), lambda i: (i, 0, 0),
                               **slab_kwargs),
        compiler_params=pltpu.CompilerParams(
            dimension_semantics=("parallel",),
            vmem_limit_bytes=vmem_limit),
    )(z, log_mu_arr, log_nu_arr, norm3)

    out = out_full[:, :sub_len, :lane_len]
    if transposed:
        out = jnp.swapaxes(out, 1, 2)
    return out                                              # (B, M+1, N+1)


def reference_forward(scores, alpha, row_masks=None, col_masks=None, *,
                      num_iter=10, inf=1.0e12):
    """Pure-JAX transliteration of the PyTorch forward for verification."""
    b, m, n = scores.shape
    if row_masks is None:
        row_masks = jnp.ones((b, m), dtype=bool)
    if col_masks is None:
        col_masks = jnp.ones((b, n), dtype=bool)
    prm = jnp.concatenate([~row_masks, jnp.zeros((b, 1), bool)], axis=1)
    pcm = jnp.concatenate([~col_masks, jnp.zeros((b, 1), bool)], axis=1)
    psm = prm[:, :, None] | pcm[:, None, :]
    padded_col = jnp.full((b, m, 1), alpha, jnp.float32)
    padded_row = jnp.full((b, 1, n + 1), alpha, jnp.float32)
    ps = jnp.concatenate(
        [jnp.concatenate([scores, padded_col], axis=-1), padded_row], axis=1)
    ps = jnp.where(psm, -inf, ps)
    nvr = row_masks.astype(jnp.float32).sum(1)
    nvc = col_masks.astype(jnp.float32).sum(1)
    norm = -jnp.log(nvr + nvc)
    log_mu = jnp.concatenate(
        [jnp.broadcast_to(norm[:, None], (b, m)), (jnp.log(nvc) + norm)[:, None]],
        axis=1)
    log_mu = jnp.where(prm, inf, log_mu)
    log_nu = jnp.concatenate(
        [jnp.broadcast_to(norm[:, None], (b, n)), (jnp.log(nvr) + norm)[:, None]],
        axis=1)
    log_nu = jnp.where(pcm, -inf, log_nu)
    u = jnp.zeros_like(log_mu)
    v = jnp.zeros_like(log_nu)
    for _ in range(num_iter):
        u = log_mu - jax.scipy.special.logsumexp(ps + v[:, None, :], axis=2)
        v = log_nu - jax.scipy.special.logsumexp(ps + u[:, :, None], axis=1)
    out = ps + u[:, :, None] + v[:, None, :]
    return out - norm[:, None, None]


if __name__ == "__main__":
    # Deterministic parameter init (module __init__: alpha = 1.0 scalar).
    NUM_ITER = 10
    ALPHA = 1.0

    key = jax.random.PRNGKey(0)
    B, M, N = 2, 16, 12
    scores = jax.random.normal(key, (B, M, N), dtype=jnp.float32)

    # Case 1: default (all-valid) masks.
    out = learnable_log_optimal_transport(scores, ALPHA, num_iter=NUM_ITER)
    out = jax.block_until_ready(out)
    ref = reference_forward(scores, ALPHA, num_iter=NUM_ITER)
    assert out.shape == (B, M + 1, N + 1)
    np.testing.assert_allclose(np.asarray(out), np.asarray(ref),
                               rtol=1e-4, atol=1e-4)

    # Case 2: partially masked columns.
    col_masks = jnp.array([[True] * N, [True] * (N - 3) + [False] * 3])
    out2 = learnable_log_optimal_transport(scores, ALPHA, col_masks=col_masks,
                                           num_iter=NUM_ITER)
    out2 = jax.block_until_ready(out2)
    ref2 = reference_forward(scores, ALPHA, col_masks=col_masks,
                             num_iter=NUM_ITER)
    np.testing.assert_allclose(np.asarray(out2), np.asarray(ref2),
                               rtol=1e-4, atol=1e-3)

    # Case 3: masked rows AND columns (exercises the +inf log_mu path).
    row_masks = jnp.array([[True] * M, [True] * (M - 4) + [False] * 4])
    out3 = learnable_log_optimal_transport(scores, ALPHA, row_masks=row_masks,
                                           col_masks=col_masks,
                                           num_iter=NUM_ITER)
    out3 = jax.block_until_ready(out3)
    ref3 = reference_forward(scores, ALPHA, row_masks=row_masks,
                             col_masks=col_masks, num_iter=NUM_ITER)
    np.testing.assert_allclose(np.asarray(out3), np.asarray(ref3),
                               rtol=1e-4, atol=1e-3)

    # Case 4: bf16 EUP exp path (perf knob for v6e/v7x) — loose tolerance.
    out_b = learnable_log_optimal_transport(scores, ALPHA, num_iter=NUM_ITER,
                                            exp_dtype=jnp.bfloat16)
    out_b = jax.block_until_ready(out_b)
    assert float(jnp.max(jnp.abs(out_b - ref))) < 0.3

    print("KERNEL_OK")
</pallas_src>

<mosaic_0001>
module attributes {stable_mosaic.version = 11 : i64} {
  func.func @_sinkhorn_kernel(%arg0: i32, %arg1: memref<1x16x128xf32, #tpu.memory_space<vmem>>, %arg2: memref<1x1x128xf32, #tpu.memory_space<vmem>>, %arg3: memref<1x16x1xf32, #tpu.memory_space<vmem>>, %arg4: memref<1x1x1xf32, #tpu.memory_space<vmem>>, %arg5: memref<1x16x128xf32, #tpu.memory_space<vmem>>) attributes {dimension_semantics = [#tpu.dimension_semantics<parallel>], iteration_bounds = array<i64: 2>, scalar_prefetch = 0 : i64, scratch_operands = 0 : i64, tpu.core_type = #tpu.core_type<tc>, window_params = [{transform_indices = @transform_0, window_bounds = array<i64: 1, 16, 128>}, {transform_indices = @transform_1, window_bounds = array<i64: 1, 1, 128>}, {transform_indices = @transform_2, window_bounds = array<i64: 1, 16, 1>}, {transform_indices = @transform_3, window_bounds = array<i64: 1, 1, 1>}, {transform_indices = @transform_4, window_bounds = array<i64: 1, 16, 128>}]} {
    %c0 = arith.constant 0 : index
    %c0_0 = arith.constant 0 : index
    %c0_1 = arith.constant 0 : index
    %0 = vector.load %arg1[%c0, %c0_0, %c0_1] : memref<1x16x128xf32, #tpu.memory_space<vmem>>, vector<1x16x128xf32>
    %c0_2 = arith.constant 0 : index
    %c0_3 = arith.constant 0 : index
    %c0_4 = arith.constant 0 : index
    %1 = vector.load %arg2[%c0_2, %c0_3, %c0_4] : memref<1x1x128xf32, #tpu.memory_space<vmem>>, vector<1x1x128xf32>
    %c0_5 = arith.constant 0 : index
    %c0_6 = arith.constant 0 : index
    %c0_7 = arith.constant 0 : index
    %2 = vector.load %arg3[%c0_5, %c0_6, %c0_7] : memref<1x16x1xf32, #tpu.memory_space<vmem>>, vector<1x16x1xf32>
    %cst = arith.constant 0.000000e+00 : f32
    %3 = vector.broadcast %cst : f32 to vector<1x1x128xf32>
    %cst_8 = arith.constant 0.000000e+00 : f32
    %4 = vector.broadcast %cst_8 : f32 to vector<1x16x1xf32>
    %c0_i32 = arith.constant 0 : i32
    %5 = vector.broadcast %4 : vector<1x16x1xf32> to vector<1x16x128xf32>
    %6 = arith.addf %0, %5 : vector<1x16x128xf32>
    %cst_9 = arith.constant dense<0xFF800000> : vector<1x128xf32>
    %7 = vector.multi_reduction <maximumf>, %6, %cst_9 [1] : vector<1x16x128xf32> to vector<1x128xf32>
    %8 = vector.shape_cast %7 : vector<1x128xf32> to vector<1x1x128xf32>
    %9 = vector.broadcast %8 : vector<1x1x128xf32> to vector<1x16x128xf32>
    %10 = arith.subf %6, %9 : vector<1x16x128xf32>
    %11 = math.exp %10 : vector<1x16x128xf32>
    %cst_10 = arith.constant dense<0.000000e+00> : vector<1x128xf32>
    %12 = vector.multi_reduction <add>, %11, %cst_10 [1] : vector<1x16x128xf32> to vector<1x128xf32>
    %13 = vector.shape_cast %12 : vector<1x128xf32> to vector<1x1x128xf32>
    %14 = math.log %13 : vector<1x1x128xf32>
    %15 = arith.addf %8, %14 : vector<1x1x128xf32>
    %16 = arith.subf %1, %15 : vector<1x1x128xf32>
    %17 = vector.broadcast %16 : vector<1x1x128xf32> to vector<1x16x128xf32>
    %18 = arith.addf %0, %17 : vector<1x16x128xf32>
    %cst_11 = arith.constant dense<0xFF800000> : vector<1x16xf32>
    %19 = vector.multi_reduction <maximumf>, %18, %cst_11 [2] : vector<1x16x128xf32> to vector<1x16xf32>
    %20 = vector.shape_cast %19 : vector<1x16xf32> to vector<1x16x1xf32>
    %21 = vector.broadcast %20 : vector<1x16x1xf32> to vector<1x16x128xf32>
    %22 = arith.subf %18, %21 : vector<1x16x128xf32>
    %23 = math.exp %22 : vector<1x16x128xf32>
    %cst_12 = arith.constant dense<0.000000e+00> : vector<1x16xf32>
    %24 = vector.multi_reduction <add>, %23, %cst_12 [2] : vector<1x16x128xf32> to vector<1x16xf32>
    %25 = vector.shape_cast %24 : vector<1x16xf32> to vector<1x16x1xf32>
    %26 = math.log %25 : vector<1x16x1xf32>
    %27 = arith.addf %20, %26 : vector<1x16x1xf32>
    %28 = arith.subf %2, %27 : vector<1x16x1xf32>
    %c1_i32 = arith.constant 1 : i32
    %29 = vector.broadcast %28 : vector<1x16x1xf32> to vector<1x16x128xf32>
    %30 = arith.addf %0, %29 : vector<1x16x128xf32>
    %cst_13 = arith.constant dense<0xFF800000> : vector<1x128xf32>
    %31 = vector.multi_reduction <maximumf>, %30, %cst_13 [1] : vector<1x16x128xf32> to vector<1x128xf32>
    %32 = vector.shape_cast %31 : vector<1x128xf32> to vector<1x1x128xf32>
    %33 = vector.broadcast %32 : vector<1x1x128xf32> to vector<1x16x128xf32>
    %34 = arith.subf %30, %33 : vector<1x16x128xf32>
    %35 = math.exp %34 : vector<1x16x128xf32>
    %cst_14 = arith.constant dense<0.000000e+00> : vector<1x128xf32>
    %36 = vector.multi_reduction <add>, %35, %cst_14 [1] : vector<1x16x128xf32> to vector<1x128xf32>
    %37 = vector.shape_cast %36 : vector<1x128xf32> to vector<1x1x128xf32>
    %38 = math.log %37 : vector<1x1x128xf32>
    %39 = arith.addf %32, %38 : vector<1x1x128xf32>
    %40 = arith.subf %1, %39 : vector<1x1x128xf32>
    %41 = vector.broadcast %40 : vector<1x1x128xf32> to vector<1x16x128xf32>
    %42 = arith.addf %0, %41 : vector<1x16x128xf32>
    %cst_15 = arith.constant dense<0xFF800000> : vector<1x16xf32>
    %43 = vector.multi_reduction <maximumf>, %42, %cst_15 [2] : vector<1x16x128xf32> to vector<1x16xf32>
    %44 = vector.shape_cast %43 : vector<1x16xf32> to vector<1x16x1xf32>
    %45 = vector.broadcast %44 : vector<1x16x1xf32> to vector<1x16x128xf32>
    %46 = arith.subf %42, %45 : vector<1x16x128xf32>
    %47 = math.exp %46 : vector<1x16x128xf32>
    %cst_16 = arith.constant dense<0.000000e+00> : vector<1x16xf32>
    %48 = vector.multi_reduction <add>, %47, %cst_16 [2] : vector<1x16x128xf32> to vector<1x16xf32>
    %49 = vector.shape_cast %48 : vector<1x16xf32> to vector<1x16x1xf32>
    %50 = math.log %49 : vector<1x16x1xf32>
    %51 = arith.addf %44, %50 : vector<1x16x1xf32>
    %52 = arith.subf %2, %51 : vector<1x16x1xf32>
    %c2_i32 = arith.constant 2 : i32
    %53 = vector.broadcast %52 : vector<1x16x1xf32> to vector<1x16x128xf32>
    %54 = arith.addf %0, %53 : vector<1x16x128xf32>
    %cst_17 = arith.constant dense<0xFF800000> : vector<1x128xf32>
    %55 = vector.multi_reduction <maximumf>, %54, %cst_17 [1] : vector<1x16x128xf32> to vector<1x128xf32>
    %56 = vector.shape_cast %55 : vector<1x128xf32> to vector<1x1x128xf32>
    %57 = vector.broadcast %56 : vector<1x1x128xf32> to vector<1x16x128xf32>
    %58 = arith.subf %54, %57 : vector<1x16x128xf32>
    %59 = math.exp %58 : vector<1x16x128xf32>
    %cst_18 = arith.constant dense<0.000000e+00> : vector<1x128xf32>
    %60 = vector.multi_reduction <add>, %59, %cst_18 [1] : vector<1x16x128xf32> to vector<1x128xf32>
    %61 = vector.shape_cast %60 : vector<1x128xf32> to vector<1x1x128xf32>
    %62 = math.log %61 : vector<1x1x128xf32>
    %63 = arith.addf %56, %62 : vector<1x1x128xf32>
    %64 = arith.subf %1, %63 : vector<1x1x128xf32>
    %65 = vector.broadcast %64 : vector<1x1x128xf32> to vector<1x16x128xf32>
    %66 = arith.addf %0, %65 : vector<1x16x128xf32>
    %cst_19 = arith.constant dense<0xFF800000> : vector<1x16xf32>
    %67 = vector.multi_reduction <maximumf>, %66, %cst_19 [2] : vector<1x16x128xf32> to vector<1x16xf32>
    %68 = vector.shape_cast %67 : vector<1x16xf32> to vector<1x16x1xf32>
    %69 = vector.broadcast %68 : vector<1x16x1xf32> to vector<1x16x128xf32>
    %70 = arith.subf %66, %69 : vector<1x16x128xf32>
    %71 = math.exp %70 : vector<1x16x128xf32>
    %cst_20 = arith.constant dense<0.000000e+00> : vector<1x16xf32>
    %72 = vector.multi_reduction <add>, %71, %cst_20 [2] : vector<1x16x128xf32> to vector<1x16xf32>
    %73 = vector.shape_cast %72 : vector<1x16xf32> to vector<1x16x1xf32>
    %74 = math.log %73 : vector<1x16x1xf32>
    %75 = arith.addf %68, %74 : vector<1x16x1xf32>
    %76 = arith.subf %2, %75 : vector<1x16x1xf32>
    %c3_i32 = arith.constant 3 : i32
    %77 = vector.broadcast %76 : vector<1x16x1xf32> to vector<1x16x128xf32>
    %78 = arith.addf %0, %77 : vector<1x16x128xf32>
    %cst_21 = arith.constant dense<0xFF800000> : vector<1x128xf32>
    %79 = vector.multi_reduction <maximumf>, %78, %cst_21 [1] : vector<1x16x128xf32> to vector<1x128xf32>
    %80 = vector.shape_cast %79 : vector<1x128xf32> to vector<1x1x128xf32>
    %81 = vector.broadcast %80 : vector<1x1x128xf32> to vector<1x16x128xf32>
    %82 = arith.subf %78, %81 : vector<1x16x128xf32>
    %83 = math.exp %82 : vector<1x16x128xf32>
    %cst_22 = arith.constant dense<0.000000e+00> : vector<1x128xf32>
    %84 = vector.multi_reduction <add>, %83, %cst_22 [1] : vector<1x16x128xf32> to vector<1x128xf32>
    %85 = vector.shape_cast %84 : vector<1x128xf32> to vector<1x1x128xf32>
    %86 = math.log %85 : vector<1x1x128xf32>
    %87 = arith.addf %80, %86 : vector<1x1x128xf32>
    %88 = arith.subf %1, %87 : vector<1x1x128xf32>
    %89 = vector.broadcast %88 : vector<1x1x128xf32> to vector<1x16x128xf32>
    %90 = arith.addf %0, %89 : vector<1x16x128xf32>
    %cst_23 = arith.constant dense<0xFF800000> : vector<1x16xf32>
    %91 = vector.multi_reduction <maximumf>, %90, %cst_23 [2] : vector<1x16x128xf32> to vector<1x16xf32>
    %92 = vector.shape_cast %91 : vector<1x16xf32> to vector<1x16x1xf32>
    %93 = vector.broadcast %92 : vector<1x16x1xf32> to vector<1x16x128xf32>
    %94 = arith.subf %90, %93 : vector<1x16x128xf32>
    %95 = math.exp %94 : vector<1x16x128xf32>
    %cst_24 = arith.constant dense<0.000000e+00> : vector<1x16xf32>
    %96 = vector.multi_reduction <add>, %95, %cst_24 [2] : vector<1x16x128xf32> to vector<1x16xf32>
    %97 = vector.shape_cast %96 : vector<1x16xf32> to vector<1x16x1xf32>
    %98 = math.log %97 : vector<1x16x1xf32>
    %99 = arith.addf %92, %98 : vector<1x16x1xf32>
    %100 = arith.subf %2, %99 : vector<1x16x1xf32>
    %c4_i32 = arith.constant 4 : i32
    %101 = vector.broadcast %100 : vector<1x16x1xf32> to vector<1x16x128xf32>
    %102 = arith.addf %0, %101 : vector<1x16x128xf32>
    %cst_25 = arith.constant dense<0xFF800000> : vector<1x128xf32>
    %103 = vector.multi_reduction <maximumf>, %102, %cst_25 [1] : vector<1x16x128xf32> to vector<1x128xf32>
    %104 = vector.shape_cast %103 : vector<1x128xf32> to vector<1x1x128xf32>
    %105 = vector.broadcast %104 : vector<1x1x128xf32> to vector<1x16x128xf32>
    %106 = arith.subf %102, %105 : vector<1x16x128xf32>
    %107 = math.exp %106 : vector<1x16x128xf32>
    %cst_26 = arith.constant dense<0.000000e+00> : vector<1x128xf32>
    %108 = vector.multi_reduction <add>, %107, %cst_26 [1] : vector<1x16x128xf32> to vector<1x128xf32>
    %109 = vector.shape_cast %108 : vector<1x128xf32> to vector<1x1x128xf32>
    %110 = math.log %109 : vector<1x1x128xf32>
    %111 = arith.addf %104, %110 : vector<1x1x128xf32>
    %112 = arith.subf %1, %111 : vector<1x1x128xf32>
    %113 = vector.broadcast %112 : vector<1x1x128xf32> to vector<1x16x128xf32>
    %114 = arith.addf %0, %113 : vector<1x16x128xf32>
    %cst_27 = arith.constant dense<0xFF800000> : vector<1x16xf32>
    %115 = vector.multi_reduction <maximumf>, %114, %cst_27 [2] : vector<1x16x128xf32> to vector<1x16xf32>
    %116 = vector.shape_cast %115 : vector<1x16xf32> to vector<1x16x1xf32>
    %117 = vector.broadcast %116 : vector<1x16x1xf32> to vector<1x16x128xf32>
    %118 = arith.subf %114, %117 : vector<1x16x128xf32>
    %119 = math.exp %118 : vector<1x16x128xf32>
    %cst_28 = arith.constant dense<0.000000e+00> : vector<1x16xf32>
    %120 = vector.multi_reduction <add>, %119, %cst_28 [2] : vector<1x16x128xf32> to vector<1x16xf32>
    %121 = vector.shape_cast %120 : vector<1x16xf32> to vector<1x16x1xf32>
    %122 = math.log %121 : vector<1x16x1xf32>
    %123 = arith.addf %116, %122 : vector<1x16x1xf32>
    %124 = arith.subf %2, %123 : vector<1x16x1xf32>
    %c5_i32 = arith.constant 5 : i32
    %125 = vector.broadcast %124 : vector<1x16x1xf32> to vector<1x16x128xf32>
    %126 = arith.addf %0, %125 : vector<1x16x128xf32>
    %cst_29 = arith.constant dense<0xFF800000> : vector<1x128xf32>
    %127 = vector.multi_reduction <maximumf>, %126, %cst_29 [1] : vector<1x16x128xf32> to vector<1x128xf32>
    %128 = vector.shape_cast %127 : vector<1x128xf32> to vector<1x1x128xf32>
    %129 = vector.broadcast %128 : vector<1x1x128xf32> to vector<1x16x128xf32>
    %130 = arith.subf %126, %129 : vector<1x16x128xf32>
    %131 = math.exp %130 : vector<1x16x128xf32>
    %cst_30 = arith.constant dense<0.000000e+00> : vector<1x128xf32>
    %132 = vector.multi_reduction <add>, %131, %cst_30 [1] : vector<1x16x128xf32> to vector<1x128xf32>
    %133 = vector.shape_cast %132 : vector<1x128xf32> to vector<1x1x128xf32>
    %134 = math.log %133 : vector<1x1x128xf32>
    %135 = arith.addf %128, %134 : vector<1x1x128xf32>
    %136 = arith.subf %1, %135 : vector<1x1x128xf32>
    %137 = vector.broadcast %136 : vector<1x1x128xf32> to vector<1x16x128xf32>
    %138 = arith.addf %0, %137 : vector<1x16x128xf32>
    %cst_31 = arith.constant dense<0xFF800000> : vector<1x16xf32>
    %139 = vector.multi_reduction <maximumf>, %138, %cst_31 [2] : vector<1x16x128xf32> to vector<1x16xf32>
    %140 = vector.shape_cast %139 : vector<1x16xf32> to vector<1x16x1xf32>
    %141 = vector.broadcast %140 : vector<1x16x1xf32> to vector<1x16x128xf32>
    %142 = arith.subf %138, %141 : vector<1x16x128xf32>
    %143 = math.exp %142 : vector<1x16x128xf32>
    %cst_32 = arith.constant dense<0.000000e+00> : vector<1x16xf32>
    %144 = vector.multi_reduction <add>, %143, %cst_32 [2] : vector<1x16x128xf32> to vector<1x16xf32>
    %145 = vector.shape_cast %144 : vector<1x16xf32> to vector<1x16x1xf32>
    %146 = math.log %145 : vector<1x16x1xf32>
    %147 = arith.addf %140, %146 : vector<1x16x1xf32>
    %148 = arith.subf %2, %147 : vector<1x16x1xf32>
    %c6_i32 = arith.constant 6 : i32
    %149 = vector.broadcast %148 : vector<1x16x1xf32> to vector<1x16x128xf32>
    %150 = arith.addf %0, %149 : vector<1x16x128xf32>
    %cst_33 = arith.constant dense<0xFF800000> : vector<1x128xf32>
    %151 = vector.multi_reduction <maximumf>, %150, %cst_33 [1] : vector<1x16x128xf32> to vector<1x128xf32>
    %152 = vector.shape_cast %151 : vector<1x128xf32> to vector<1x1x128xf32>
    %153 = vector.broadcast %152 : vector<1x1x128xf32> to vector<1x16x128xf32>
    %154 = arith.subf %150, %153 : vector<1x16x128xf32>
    %155 = math.exp %154 : vector<1x16x128xf32>
    %cst_34 = arith.constant dense<0.000000e+00> : vector<1x128xf32>
    %156 = vector.multi_reduction <add>, %155, %cst_34 [1] : vector<1x16x128xf32> to vector<1x128xf32>
    %157 = vector.shape_cast %156 : vector<1x128xf32> to vector<1x1x128xf32>
    %158 = math.log %157 : vector<1x1x128xf32>
    %159 = arith.addf %152, %158 : vector<1x1x128xf32>
    %160 = arith.subf %1, %159 : vector<1x1x128xf32>
    %161 = vector.broadcast %160 : vector<1x1x128xf32> to vector<1x16x128xf32>
    %162 = arith.addf %0, %161 : vector<1x16x128xf32>
    %cst_35 = arith.constant dense<0xFF800000> : vector<1x16xf32>
    %163 = vector.multi_reduction <maximumf>, %162, %cst_35 [2] : vector<1x16x128xf32> to vector<1x16xf32>
    %164 = vector.shape_cast %163 : vector<1x16xf32> to vector<1x16x1xf32>
    %165 = vector.broadcast %164 : vector<1x16x1xf32> to vector<1x16x128xf32>
    %166 = arith.subf %162, %165 : vector<1x16x128xf32>
    %167 = math.exp %166 : vector<1x16x128xf32>
    %cst_36 = arith.constant dense<0.000000e+00> : vector<1x16xf32>
    %168 = vector.multi_reduction <add>, %167, %cst_36 [2] : vector<1x16x128xf32> to vector<1x16xf32>
    %169 = vector.shape_cast %168 : vector<1x16xf32> to vector<1x16x1xf32>
    %170 = math.log %169 : vector<1x16x1xf32>
    %171 = arith.addf %164, %170 : vector<1x16x1xf32>
    %172 = arith.subf %2, %171 : vector<1x16x1xf32>
    %c7_i32 = arith.constant 7 : i32
    %173 = vector.broadcast %172 : vector<1x16x1xf32> to vector<1x16x128xf32>
    %174 = arith.addf %0, %173 : vector<1x16x128xf32>
    %cst_37 = arith.constant dense<0xFF800000> : vector<1x128xf32>
    %175 = vector.multi_reduction <maximumf>, %174, %cst_37 [1] : vector<1x16x128xf32> to vector<1x128xf32>
    %176 = vector.shape_cast %175 : vector<1x128xf32> to vector<1x1x128xf32>
    %177 = vector.broadcast %176 : vector<1x1x128xf32> to vector<1x16x128xf32>
    %178 = arith.subf %174, %177 : vector<1x16x128xf32>
    %179 = math.exp %178 : vector<1x16x128xf32>
    %cst_38 = arith.constant dense<0.000000e+00> : vector<1x128xf32>
    %180 = vector.multi_reduction <add>, %179, %cst_38 [1] : vector<1x16x128xf32> to vector<1x128xf32>
    %181 = vector.shape_cast %180 : vector<1x128xf32> to vector<1x1x128xf32>
    %182 = math.log %181 : vector<1x1x128xf32>
    %183 = arith.addf %176, %182 : vector<1x1x128xf32>
    %184 = arith.subf %1, %183 : vector<1x1x128xf32>
    %185 = vector.broadcast %184 : vector<1x1x128xf32> to vector<1x16x128xf32>
    %186 = arith.addf %0, %185 : vector<1x16x128xf32>
    %cst_39 = arith.constant dense<0xFF800000> : vector<1x16xf32>
    %187 = vector.multi_reduction <maximumf>, %186, %cst_39 [2] : vector<1x16x128xf32> to vector<1x16xf32>
    %188 = vector.shape_cast %187 : vector<1x16xf32> to vector<1x16x1xf32>
    %189 = vector.broadcast %188 : vector<1x16x1xf32> to vector<1x16x128xf32>
    %190 = arith.subf %186, %189 : vector<1x16x128xf32>
    %191 = math.exp %190 : vector<1x16x128xf32>
    %cst_40 = arith.constant dense<0.000000e+00> : vector<1x16xf32>
    %192 = vector.multi_reduction <add>, %191, %cst_40 [2] : vector<1x16x128xf32> to vector<1x16xf32>
    %193 = vector.shape_cast %192 : vector<1x16xf32> to vector<1x16x1xf32>
    %194 = math.log %193 : vector<1x16x1xf32>
    %195 = arith.addf %188, %194 : vector<1x16x1xf32>
    %196 = arith.subf %2, %195 : vector<1x16x1xf32>
    %c8_i32 = arith.constant 8 : i32
    %197 = vector.broadcast %196 : vector<1x16x1xf32> to vector<1x16x128xf32>
    %198 = arith.addf %0, %197 : vector<1x16x128xf32>
    %cst_41 = arith.constant dense<0xFF800000> : vector<1x128xf32>
    %199 = vector.multi_reduction <maximumf>, %198, %cst_41 [1] : vector<1x16x128xf32> to vector<1x128xf32>
    %200 = vector.shape_cast %199 : vector<1x128xf32> to vector<1x1x128xf32>
    %201 = vector.broadcast %200 : vector<1x1x128xf32> to vector<1x16x128xf32>
    %202 = arith.subf %198, %201 : vector<1x16x128xf32>
    %203 = math.exp %202 : vector<1x16x128xf32>
    %cst_42 = arith.constant dense<0.000000e+00> : vector<1x128xf32>
    %204 = vector.multi_reduction <add>, %203, %cst_42 [1] : vector<1x16x128xf32> to vector<1x128xf32>
    %205 = vector.shape_cast %204 : vector<1x128xf32> to vector<1x1x128xf32>
    %206 = math.log %205 : vector<1x1x128xf32>
    %207 = arith.addf %200, %206 : vector<1x1x128xf32>
    %208 = arith.subf %1, %207 : vector<1x1x128xf32>
    %209 = vector.broadcast %208 : vector<1x1x128xf32> to vector<1x16x128xf32>
    %210 = arith.addf %0, %209 : vector<1x16x128xf32>
    %cst_43 = arith.constant dense<0xFF800000> : vector<1x16xf32>
    %211 = vector.multi_reduction <maximumf>, %210, %cst_43 [2] : vector<1x16x128xf32> to vector<1x16xf32>
    %212 = vector.shape_cast %211 : vector<1x16xf32> to vector<1x16x1xf32>
    %213 = vector.broadcast %212 : vector<1x16x1xf32> to vector<1x16x128xf32>
    %214 = arith.subf %210, %213 : vector<1x16x128xf32>
    %215 = math.exp %214 : vector<1x16x128xf32>
    %cst_44 = arith.constant dense<0.000000e+00> : vector<1x16xf32>
    %216 = vector.multi_reduction <add>, %215, %cst_44 [2] : vector<1x16x128xf32> to vector<1x16xf32>
    %217 = vector.shape_cast %216 : vector<1x16xf32> to vector<1x16x1xf32>
    %218 = math.log %217 : vector<1x16x1xf32>
    %219 = arith.addf %212, %218 : vector<1x16x1xf32>
    %220 = arith.subf %2, %219 : vector<1x16x1xf32>
    %c9_i32 = arith.constant 9 : i32
    %221 = vector.broadcast %220 : vector<1x16x1xf32> to vector<1x16x128xf32>
    %222 = arith.addf %0, %221 : vector<1x16x128xf32>
    %cst_45 = arith.constant dense<0xFF800000> : vector<1x128xf32>
    %223 = vector.multi_reduction <maximumf>, %222, %cst_45 [1] : vector<1x16x128xf32> to vector<1x128xf32>
    %224 = vector.shape_cast %223 : vector<1x128xf32> to vector<1x1x128xf32>
    %225 = vector.broadcast %224 : vector<1x1x128xf32> to vector<1x16x128xf32>
    %226 = arith.subf %222, %225 : vector<1x16x128xf32>
    %227 = math.exp %226 : vector<1x16x128xf32>
    %cst_46 = arith.constant dense<0.000000e+00> : vector<1x128xf32>
    %228 = vector.multi_reduction <add>, %227, %cst_46 [1] : vector<1x16x128xf32> to vector<1x128xf32>
    %229 = vector.shape_cast %228 : vector<1x128xf32> to vector<1x1x128xf32>
    %230 = math.log %229 : vector<1x1x128xf32>
    %231 = arith.addf %224, %230 : vector<1x1x128xf32>
    %232 = arith.subf %1, %231 : vector<1x1x128xf32>
    %233 = vector.broadcast %232 : vector<1x1x128xf32> to vector<1x16x128xf32>
    %234 = arith.addf %0, %233 : vector<1x16x128xf32>
    %cst_47 = arith.constant dense<0xFF800000> : vector<1x16xf32>
    %235 = vector.multi_reduction <maximumf>, %234, %cst_47 [2] : vector<1x16x128xf32> to vector<1x16xf32>
    %236 = vector.shape_cast %235 : vector<1x16xf32> to vector<1x16x1xf32>
    %237 = vector.broadcast %236 : vector<1x16x1xf32> to vector<1x16x128xf32>
    %238 = arith.subf %234, %237 : vector<1x16x128xf32>
    %239 = math.exp %238 : vector<1x16x128xf32>
    %cst_48 = arith.constant dense<0.000000e+00> : vector<1x16xf32>
    %240 = vector.multi_reduction <add>, %239, %cst_48 [2] : vector<1x16x128xf32> to vector<1x16xf32>
    %241 = vector.shape_cast %240 : vector<1x16xf32> to vector<1x16x1xf32>
    %242 = math.log %241 : vector<1x16x1xf32>
    %243 = arith.addf %236, %242 : vector<1x16x1xf32>
    %244 = arith.subf %2, %243 : vector<1x16x1xf32>
    %245 = vector.broadcast %232 : vector<1x1x128xf32> to vector<1x16x128xf32>
    %246 = arith.addf %0, %245 : vector<1x16x128xf32>
    %247 = vector.broadcast %244 : vector<1x16x1xf32> to vector<1x16x128xf32>
    %248 = arith.addf %246, %247 : vector<1x16x128xf32>
    %c0_49 = arith.constant 0 : index
    %c0_50 = arith.constant 0 : index
    %c0_51 = arith.constant 0 : index
    %249 = vector.load %arg4[%c0_49, %c0_50, %c0_51] : memref<1x1x1xf32, #tpu.memory_space<vmem>>, vector<1x1x1xf32>
    %250 = vector.broadcast %249 : vector<1x1x1xf32> to vector<1x16x128xf32>
    %251 = arith.subf %248, %250 : vector<1x16x128xf32>
    %c0_52 = arith.constant 0 : index
    %c0_53 = arith.constant 0 : index
    %c0_54 = arith.constant 0 : index
    %252 = vector.load %arg5[%c0_52, %c0_53, %c0_54] : memref<1x16x128xf32, #tpu.memory_space<vmem>>, vector<1x16x128xf32>
    tpu.vector_store %arg5[%c0_52, %c0_53, %c0_54], %251 {strides = array<i32>} : memref<1x16x128xf32, #tpu.memory_space<vmem>>, vector<1x16x128xf32>,
    return
  }
  func.func @transform_0(%arg0: i32) -> (i32, i32, i32) {
    %c0_i32 = arith.constant 0 : i32
    %c0_i32_0 = arith.constant 0 : i32
    %c0_i32_1 = arith.constant 0 : i32
    return %arg0, %c0_i32, %c0_i32_0 : i32, i32, i32
  }
  func.func @transform_1(%arg0: i32) -> (i32, i32, i32) {
    %c0_i32 = arith.constant 0 : i32
    %c0_i32_0 = arith.constant 0 : i32
    %c0_i32_1 = arith.constant 0 : i32
    return %arg0, %c0_i32, %c0_i32_0 : i32, i32, i32
  }
  func.func @transform_2(%arg0: i32) -> (i32, i32, i32) {
    %c0_i32 = arith.constant 0 : i32
    %c0_i32_0 = arith.constant 0 : i32
    %c0_i32_1 = arith.constant 0 : i32
    return %arg0, %c0_i32, %c0_i32_0 : i32, i32, i32
  }
  func.func @transform_3(%arg0: i32) -> (i32, i32, i32) {
    %c0_i32 = arith.constant 0 : i32
    %c0_i32_0 = arith.constant 0 : i32
    %c0_i32_1 = arith.constant 0 : i32
    return %arg0, %c0_i32, %c0_i32_0 : i32, i32, i32
  }
  func.func @transform_4(%arg0: i32) -> (i32, i32, i32) {
    %c0_i32 = arith.constant 0 : i32
    %c0_i32_0 = arith.constant 0 : i32
    %c0_i32_1 = arith.constant 0 : i32
    return %arg0, %c0_i32, %c0_i32_0 : i32, i32, i32
  }
}

</mosaic_0001>

<llo_original>
// kernel: tpu_custom_call.1
$region0: #{tpu_custom_call.1}
  #allocation0 [shape = 'u32[]', space=smem, size = 0x4, offset = 0x4, fixed_abs, tag = 'smem constant byte address 0x4 - core index']
  #allocation1 [shape = 'u32[144,128]{1,0:T(1,128)}', space=vmem, size = 0x12000, scoped, tag = 'internal scratch']
  %s0 = inlined_call_operand.vmem [shape: f32[2,16,128], index: 0, kind: input, shape index: {}]
  %s1 = inlined_call_operand.vmem [shape: f32[2,1,128], index: 1, kind: input, shape index: {}]
  %s2 = inlined_call_operand.vmem [shape: f32[2,16,1], index: 2, kind: input, shape index: {}]
  %s3 = inlined_call_operand.vmem [shape: f32[2,1,1], index: 3, kind: input, shape index: {}]
  %s4 = inlined_call_operand.hbm [shape: f32[2,16,128], index: 4, kind: output, shape index: {}]
  %s5 = sld [smem:[#allocation0]]
  $region49: #{tpu_custom_call.1} parent=0
    _
  %s7 = ssub.s32 1, %s5
  %s8 = scalar_select 0, %s7, %s5
  $region1: #{tpu_custom_call.1} parent=0
    #allocation2 [shape = 'u8[16384]{0}', space=vmem, size = 0x4000, scoped, tag = 'output window, operand 0']
    #allocation3 [shape = 's32[2]{0}', space=sflag, size = 0x8, scoped, tag = 'scoped memory for tpu_custom_call.1']
    %9 = vsyncpa [#allocation3], 0
    %s10 = scalar_lea.sflag [#allocation3], 1
    %11 = vsyncpa %s10, 0
    loop: start=0, step=1, limit=4
    $region2: #{tpu_custom_call.1} parent=1 // loop_pre_header
      _
    $region3: #{tpu_custom_call.1} parent=1 // loop_header
      %s13 = sphi 0, %s17
      %p14 = scmp.ge.s32.totalorder %s13, 4
      %s23 = sphi 0, %s25
      %s26 = sphi 0, %s23
      %s27 = sphi 0, %s26
      %s43 = sphi 0, %s27
      %s49 = sphi 0, %s51
      %s52 = sphi 0, %s49
      %s53 = sphi 0, %s52
      %s69 = sphi 0, %s53
      %s75 = sphi 0, %s77
      %s78 = sphi 0, %s75
      %s79 = sphi 0, %s78
      %s95 = sphi 0, %s79
      %s101 = sphi 0, %s103
      %s104 = sphi 0, %s101
      %s105 = sphi 0, %s104
      %s121 = sphi 0, %s105
      %s127 = sphi 0, %s129
      %s130 = sphi 0, %s127
      %s131 = sphi 0, %s130
      %s147 = sphi 0, %s131
    $region4: #{tpu_custom_call.1} parent=1 // loop_header_branch
      %16 = sbr.rel (%p14) target = $region8
    $region5: #{tpu_custom_call.1} parent=1 // loop_body
      %s18 = ssub.s32 %s13, 1
      %s19 = ssub.s32 %s13, 2
      %s20 = sadd.s32 %s13, 1
      %s21 = ssub.s32 %s13, %s20
      %p22 = scmp.eq.s32.totalorder %s21, 0
      %s24 = sadd.s32 %s23, 1
      %s25 = scalar_select %p22, %s23, %s24
      %p28 = pneg %p22
      %p29 = scmp.eq.s32.totalorder %s13, 1
      %p30 = por %p28, %p29
      %p31 = scmp.ne.s32.totalorder %s23, %s26
      %p32 = scmp.eq.s32.totalorder %s13, 0
      %p33 = por %p31, %p32
      %p34 = scmp.ne.s32.totalorder %s23, %s26
      %p35 = scmp.eq.s32.totalorder %s18, 1
      %p36 = por %p34, %p35
      %p37 = scmp.ne.s32.totalorder %s26, %s27
      %p38 = scmp.eq.s32.totalorder %s18, 0
      %p39 = por %p37, %p38
      %p40 = scmp.ne.s32.totalorder %s26, %s27
      %p41 = scmp.eq.s32.totalorder %s19, 1
      %p42 = por %p40, %p41
      %p44 = scmp.ne.s32.totalorder %s27, %s43
      %p45 = scmp.eq.s32.totalorder %s19, 0
      %p46 = por %p44, %p45
      %s47 = ssub.s32 %s13, %s20
      %p48 = scmp.eq.s32.totalorder %s47, 0
      %s50 = sadd.s32 %s49, 1
      %s51 = scalar_select %p48, %s49, %s50
      %p54 = pneg %p48
      %p55 = scmp.eq.s32.totalorder %s13, 1
      %p56 = por %p54, %p55
      %p57 = scmp.ne.s32.totalorder %s49, %s52
      %p58 = scmp.eq.s32.totalorder %s13, 0
      %p59 = por %p57, %p58
      %p60 = scmp.ne.s32.totalorder %s49, %s52
      %p61 = scmp.eq.s32.totalorder %s18, 1
      %p62 = por %p60, %p61
      %p63 = scmp.ne.s32.totalorder %s52, %s53
      %p64 = scmp.eq.s32.totalorder %s18, 0
      %p65 = por %p63, %p64
      %p66 = scmp.ne.s32.totalorder %s52, %s53
      %p67 = scmp.eq.s32.totalorder %s19, 1
      %p68 = por %p66, %p67
      %p70 = scmp.ne.s32.totalorder %s53, %s69
      %p71 = scmp.eq.s32.totalorder %s19, 0
      %p72 = por %p70, %p71
      %s73 = ssub.s32 %s13, %s20
      %p74 = scmp.eq.s32.totalorder %s73, 0
      %s76 = sadd.s32 %s75, 1
      %s77 = scalar_select %p74, %s75, %s76
      %p80 = pneg %p74
      %p81 = scmp.eq.s32.totalorder %s13, 1
      %p82 = por %p80, %p81
      %p83 = scmp.ne.s32.totalorder %s75, %s78
      %p84 = scmp.eq.s32.totalorder %s13, 0
      %p85 = por %p83, %p84
      %p86 = scmp.ne.s32.totalorder %s75, %s78
      %p87 = scmp.eq.s32.totalorder %s18, 1
      %p88 = por %p86, %p87
      %p89 = scmp.ne.s32.totalorder %s78, %s79
      %p90 = scmp.eq.s32.totalorder %s18, 0
      %p91 = por %p89, %p90
      %p92 = scmp.ne.s32.totalorder %s78, %s79
      %p93 = scmp.eq.s32.totalorder %s19, 1
      %p94 = por %p92, %p93
      %p96 = scmp.ne.s32.totalorder %s79, %s95
      %p97 = scmp.eq.s32.totalorder %s19, 0
      %p98 = por %p96, %p97
      %s99 = ssub.s32 %s13, %s20
      %p100 = scmp.eq.s32.totalorder %s99, 0
      %s102 = sadd.s32 %s101, 1
      %s103 = scalar_select %p100, %s101, %s102
      %p106 = pneg %p100
      %p107 = scmp.eq.s32.totalorder %s13, 1
      %p108 = por %p106, %p107
      %p109 = scmp.ne.s32.totalorder %s101, %s104
      %p110 = scmp.eq.s32.totalorder %s13, 0
      %p111 = por %p109, %p110
      %p112 = scmp.ne.s32.totalorder %s101, %s104
      %p113 = scmp.eq.s32.totalorder %s18, 1
      %p114 = por %p112, %p113
      %p115 = scmp.ne.s32.totalorder %s104, %s105
      %p116 = scmp.eq.s32.totalorder %s18, 0
      %p117 = por %p115, %p116
      %p118 = scmp.ne.s32.totalorder %s104, %s105
      %p119 = scmp.eq.s32.totalorder %s19, 1
      %p120 = por %p118, %p119
      %p122 = scmp.ne.s32.totalorder %s105, %s121
      %p123 = scmp.eq.s32.totalorder %s19, 0
      %p124 = por %p122, %p123
      %s125 = ssub.s32 %s13, %s20
      %p126 = scmp.eq.s32.totalorder %s125, 0
      %s128 = sadd.s32 %s127, 1
      %s129 = scalar_select %p126, %s127, %s128
      %p132 = pneg %p126
      %p133 = scmp.eq.s32.totalorder %s13, 1
      %p134 = por %p132, %p133
      %p135 = scmp.ne.s32.totalorder %s127, %s130
      %p136 = scmp.eq.s32.totalorder %s13, 0
      %p137 = por %p135, %p136
      %p138 = scmp.ne.s32.totalorder %s127, %s130
      %p139 = scmp.eq.s32.totalorder %s18, 1
      %p140 = por %p138, %p139
      %p141 = scmp.ne.s32.totalorder %s130, %s131
      %p142 = scmp.eq.s32.totalorder %s18, 0
      %p143 = por %p141, %p142
      %p144 = scmp.ne.s32.totalorder %s130, %s131
      %p145 = scmp.eq.s32.totalorder %s19, 1
      %p146 = por %p144, %p145
      %p148 = scmp.ne.s32.totalorder %s131, %s147
      %p149 = scmp.eq.s32.totalorder %s19, 0
      %p150 = por %p148, %p149
      %p151 = scmp.le.s32.totalorder 1, %s13
      %p152 = scmp.lt.s32.totalorder %s13, 3
      %p153 = pnand %p151, %p152
      %p154 = pneg %p153
      // Predicated region
      $region9: #{tpu_custom_call.1} parent=5 // pred_check
        _
      $region10: #{tpu_custom_call.1} parent=5 // pred_check_branch
        %156 = sbr.rel (%p153) target = $region12
      $region11: #{tpu_custom_call.1} parent=5 // pred_region
        %s157 = ssub.s32 %s13, 1
      $region12: #{tpu_custom_call.1} parent=5 // pred_fallthru
        _
      %p158 = scmp.lt.s32.totalorder %s13, 2
      // Predicated region
      $region13: #{tpu_custom_call.1} parent=5 // pred_check
        %p159 = pneg %p158
      $region14: #{tpu_custom_call.1} parent=5 // pred_check_branch
        %161 = sbr.rel (%p159) target = $region16
      $region15: #{tpu_custom_call.1} parent=5 // pred_region
        // Predicated region
        $region17: #{tpu_custom_call.1} parent=15 // pred_check
          %p162 = pneg %p33
        $region18: #{tpu_custom_call.1} parent=15 // pred_check_branch
          %164 = sbr.rel (%p162) target = $region20
        $region19: #{tpu_custom_call.1} parent=15 // pred_region
          %p165 = scmp.lt.s32.totalorder %s13, 1
          %s166 = scalar_select %p165, %s13, 1
          %s167 = smul.addr %s166, 2
          %s168 = smul.addr %s167, 8
          %s169 = scalar_lea.vmem %s0, %s168
        $region20: #{tpu_custom_call.1} parent=15 // pred_fallthru
          _
        // Predicated region
        $region21: #{tpu_custom_call.1} parent=15 // pred_check
          %p170 = pneg %p59
        $region22: #{tpu_custom_call.1} parent=15 // pred_check_branch
          %172 = sbr.rel (%p170) target = $region24
        $region23: #{tpu_custom_call.1} parent=15 // pred_region
          %p173 = scmp.lt.s32.totalorder %s13, 1
          %s174 = scalar_select %p173, %s13, 1
          %s175 = scalar_lea.vmem %s1, %s174
        $region24: #{tpu_custom_call.1} parent=15 // pred_fallthru
          _
        // Predicated region
        $region25: #{tpu_custom_call.1} parent=15 // pred_check
          %p176 = pneg %p85
        $region26: #{tpu_custom_call.1} parent=15 // pred_check_branch
          %178 = sbr.rel (%p176) target = $region28
        $region27: #{tpu_custom_call.1} parent=15 // pred_region
          %p179 = scmp.lt.s32.totalorder %s13, 1
          %s180 = scalar_select %p179, %s13, 1
          %s181 = smul.addr %s180, 2
          %s182 = smul.addr %s181, 8
          %s183 = scalar_lea.vmem %s2, %s182
        $region28: #{tpu_custom_call.1} parent=15 // pred_fallthru
          _
        // Predicated region
        $region29: #{tpu_custom_call.1} parent=15 // pred_check
          %p184 = pneg %p111
        $region30: #{tpu_custom_call.1} parent=15 // pred_check_branch
          %186 = sbr.rel (%p184) target = $region32
        $region31: #{tpu_custom_call.1} parent=15 // pred_region
          %p187 = scmp.lt.s32.totalorder %s13, 1
          %s188 = scalar_select %p187, %s13, 1
          %s189 = scalar_lea.vmem %s3, %s188
        $region32: #{tpu_custom_call.1} parent=15 // pred_fallthru
          _
      $region16: #{tpu_custom_call.1} parent=5 // pred_fallthru
        _
      %p190 = scmp.le.s32.totalorder 1, %s13
      %p191 = scmp.lt.s32.totalorder %s13, 3
      %p192 = pnand %p190, %p191
      %p193 = pneg %p192
      // Predicated region
      $region33: #{tpu_custom_call.1} parent=5 // pred_check
        _
      $region34: #{tpu_custom_call.1} parent=5 // pred_check_branch
        %195 = sbr.rel (%p192) target = $region36
      $region35: #{tpu_custom_call.1} parent=5 // pred_region
        %s196 = ssub.s32 %s13, 1
        %p197 = scmp.lt.s32.totalorder %s18, 1
        %s198 = scalar_select %p197, %s18, 1
        %s199 = smul.addr %s198, 2
        %s200 = smul.addr %s199, 8
        %s201 = scalar_lea.vmem %s0, %s200
        %p202 = pneg %p39
        %p203 = pneg %p36
        %p204 = scmp.lt.s32.totalorder %s18, 1
        %s205 = scalar_select %p204, %s18, 1
        %s206 = scalar_lea.vmem %s1, %s205
        %p207 = pneg %p65
        %p208 = pneg %p62
        %p209 = scmp.lt.s32.totalorder %s18, 1
        %s210 = scalar_select %p209, %s18, 1
        %s211 = smul.addr %s210, 2
        %s212 = smul.addr %s211, 8
        %s213 = scalar_lea.vmem %s2, %s212
        %p214 = pneg %p91
        %p215 = pneg %p88
        %p216 = scmp.lt.s32.totalorder %s18, 1
        %s217 = scalar_select %p216, %s18, 1
        %s218 = scalar_lea.vmem %s3, %s217
        %p219 = pneg %p117
        %p220 = pneg %p114
        %p221 = pneg %p143
        %p222 = pneg %p140
        %s223 = sand.u32 %s130, 1
        %s224 = scalar_lea.sflag [#allocation3], %s223
        %s225 = sand.u32 %s130, 1
        %s226 = smul.addr %s225, 16
        %s227 = scalar_lea.vmem [#allocation2], %s226
        %p228 = scmp.lt.s32.totalorder %s18, 1
        %s229 = scalar_select %p228, %s18, 1
        %s230 = smul.addr %s229, 2
        %s231 = smul.addr %s230, 8
        %s232 = scalar_lea.vmem %s0, %s231
        %p233 = scmp.lt.s32.totalorder %s18, 1
        %s234 = scalar_select %p233, %s18, 1
        %s235 = scalar_lea.vmem %s1, %s234
        %p236 = scmp.lt.s32.totalorder %s18, 1
        %s237 = scalar_select %p236, %s18, 1
        %s238 = smul.addr %s237, 2
        %s239 = smul.addr %s238, 8
        %s240 = scalar_lea.vmem %s2, %s239
        %p241 = scmp.lt.s32.totalorder %s18, 1
        %s242 = scalar_select %p241, %s18, 1
        %s243 = scalar_lea.vmem %s3, %s242
        %v244 = vld [vmem:[%s232] sm:$0xff]
        %v245 = vld [vmem:[%s232 + $0x8] sm:$0xff]
        %v246 = vld [vmem:[%s235] sm:$0x1]
        %v247 = vld [vmem:[%s240] sm:$0xff]
        %v248 = vld [vmem:[%s240 + $0x8] sm:$0xff]
        %v249 = vadd.f32 %v244, 0.0
        %v250 = vadd.f32 %v245, 0.0
        %v251 = vmax.f32 %v249, %v250
        %v252 = vrot.slane %v251, 4
        %v253 = vmax.f32 %v251, %v252
        %v254 = vrot.slane %v253, 2
        %v255 = vmax.f32 %v253, %v254
        %v256 = vrot.slane %v255, 1
        %v257 = vmax.f32 %v255, %v256
        %v258 = vsub.f32 %v249, %v257
        %v259 = vsub.f32 %v250, %v257
        %v260 = vmul.f32 %v258, 1.442695
        %v261 = vpow.pop %v260
        %v262 = vmul.f32 %v259, 1.442695
        %v263 = vpow.pop %v262
        %v264 = vadd.f32 %v261, %v263
        %v265 = vrot.slane %v264, 4
        %v266 = vadd.f32 %v264, %v265
        %v267 = vrot.slane %v266, 2
        %v268 = vadd.f32 %v266, %v267
        %v269 = vrot.slane %v268, 1
        %v270 = vadd.f32 %v268, %v269
        %v271 = vlog2.pop %v270
        %v272 = vmul.f32 %v271, 0.6931472
        %v273 = vadd.f32 %v257, %v272
        %v274 = vsub.f32 %v246, %v273
        %v276 = vlaneseq
        %v277 = vshrl.u32 %v276, 7
        %v278 = vsub.s32 0, %v277
        %v279 = vrot.slane %v274, %v278
        %v281 = vadd.f32 %v244, %v279
        %v282 = vadd.f32 %v245, %v279
        %283 = vmax.xlane.f32.xlu0 %v281
        %v284 = vpop.xlane.xlu0 %283
        %285 = vmax.xlane.f32.xlu0 %v282
        %v286 = vpop.xlane.xlu0 %285
        %v287 = vsub.f32 %v281, %v284
        %v288 = vsub.f32 %v282, %v286
        %v289 = vmul.f32 %v287, 1.442695
        %v290 = vpow.pop %v289
        %v291 = vmul.f32 %v288, 1.442695
        %v292 = vpow.pop %v291
        %293 = vadd.xlane.f32.xlu0 %v290
        %v294 = vpop.xlane.xlu0 %293
        %295 = vadd.xlane.f32.xlu0 %v292
        %v296 = vpop.xlane.xlu0 %295
        %v297 = vlog2.pop %v294
        %v298 = vmul.f32 %v297, 0.6931472
        %v299 = vlog2.pop %v296
        %v300 = vmul.f32 %v299, 0.6931472
        %v301 = vadd.f32 %v284, %v298
        %v302 = vadd.f32 %v286, %v300
        %v303 = vsub.f32 %v247, %v301
        %v304 = vsub.f32 %v248, %v302
        %306 = vset.pattern.permute.xlu0 0
        %307 = vperm.xlu0 %306, %v303
        %v308 = vpop.permute.xlu0 %307
        %311 = vset.pattern.permute.xlu0 0
        %312 = vperm.xlu0 %311, %v304
        %v313 = vpop.permute.xlu0 %312
        %v315 = vadd.f32 %v244, %v308
        %v316 = vadd.f32 %v245, %v313
        %v317 = vmax.f32 %v315, %v316
        %v318 = vrot.slane %v317, 4
        %v319 = vmax.f32 %v317, %v318
        %v320 = vrot.slane %v319, 2
        %v321 = vmax.f32 %v319, %v320
        %v322 = vrot.slane %v321, 1
        %v323 = vmax.f32 %v321, %v322
        %v324 = vsub.f32 %v315, %v323
        %v325 = vsub.f32 %v316, %v323
        %v326 = vmul.f32 %v324, 1.442695
        %v327 = vpow.pop %v326
        %v328 = vmul.f32 %v325, 1.442695
        %v329 = vpow.pop %v328
        %v330 = vadd.f32 %v327, %v329
        %v331 = vrot.slane %v330, 4
        %v332 = vadd.f32 %v330, %v331
        %v333 = vrot.slane %v332, 2
        %v334 = vadd.f32 %v332, %v333
        %v335 = vrot.slane %v334, 1
        %v336 = vadd.f32 %v334, %v335
        %v337 = vlog2.pop %v336
        %v338 = vmul.f32 %v337, 0.6931472
        %v339 = vadd.f32 %v323, %v338
        %v340 = vsub.f32 %v246, %v339
        %v342 = vlaneseq
        %v343 = vshrl.u32 %v342, 7
        %v344 = vsub.s32 0, %v343
        %v345 = vrot.slane %v340, %v344
        %v347 = vadd.f32 %v244, %v345
        %v348 = vadd.f32 %v245, %v345
        %349 = vmax.xlane.f32.xlu0 %v347
        %v350 = vpop.xlane.xlu0 %349
        %351 = vmax.xlane.f32.xlu0 %v348
        %v352 = vpop.xlane.xlu0 %351
        %v353 = vsub.f32 %v347, %v350
        %v354 = vsub.f32 %v348, %v352
        %v355 = vmul.f32 %v353, 1.442695
        %v356 = vpow.pop %v355
        %v357 = vmul.f32 %v354, 1.442695
        %v358 = vpow.pop %v357
        %359 = vadd.xlane.f32.xlu0 %v356
        %v360 = vpop.xlane.xlu0 %359
        %361 = vadd.xlane.f32.xlu0 %v358
        %v362 = vpop.xlane.xlu0 %361
        %v363 = vlog2.pop %v360
        %v364 = vmul.f32 %v363, 0.6931472
        %v365 = vlog2.pop %v362
        %v366 = vmul.f32 %v365, 0.6931472
        %v367 = vadd.f32 %v350, %v364
        %v368 = vadd.f32 %v352, %v366
        %v369 = vsub.f32 %v247, %v367
        %v370 = vsub.f32 %v248, %v368
        %372 = vset.pattern.permute.xlu0 0
        %373 = vperm.xlu0 %372, %v369
        %v374 = vpop.permute.xlu0 %373
        %377 = vset.pattern.permute.xlu0 0
        %378 = vperm.xlu0 %377, %v370
        %v379 = vpop.permute.xlu0 %378
        %v381 = vadd.f32 %v244, %v374
        %v382 = vadd.f32 %v245, %v379
        %v383 = vmax.f32 %v381, %v382
        %v384 = vrot.slane %v383, 4
        %v385 = vmax.f32 %v383, %v384
        %v386 = vrot.slane %v385, 2
        %v387 = vmax.f32 %v385, %v386
        %v388 = vrot.slane %v387, 1
        %v389 = vmax.f32 %v387, %v388
        %v390 = vsub.f32 %v381, %v389
        %v391 = vsub.f32 %v382, %v389
        %v392 = vmul.f32 %v390, 1.442695
        %v393 = vpow.pop %v392
        %v394 = vmul.f32 %v391, 1.442695
        %v395 = vpow.pop %v394
        %v396 = vadd.f32 %v393, %v395
        %v397 = vrot.slane %v396, 4
        %v398 = vadd.f32 %v396, %v397
        %v399 = vrot.slane %v398, 2
        %v400 = vadd.f32 %v398, %v399
        %v401 = vrot.slane %v400, 1
        %v402 = vadd.f32 %v400, %v401
        %v403 = vlog2.pop %v402
        %v404 = vmul.f32 %v403, 0.6931472
        %v405 = vadd.f32 %v389, %v404
        %v406 = vsub.f32 %v246, %v405
        %v408 = vlaneseq
        %v409 = vshrl.u32 %v408, 7
        %v410 = vsub.s32 0, %v409
        %v411 = vrot.slane %v406, %v410
        %v413 = vadd.f32 %v244, %v411
        %v414 = vadd.f32 %v245, %v411
        %415 = vmax.xlane.f32.xlu0 %v413
        %v416 = vpop.xlane.xlu0 %415
        %417 = vmax.xlane.f32.xlu0 %v414
        %v418 = vpop.xlane.xlu0 %417
        %v419 = vsub.f32 %v413, %v416
        %v420 = vsub.f32 %v414, %v418
        %v421 = vmul.f32 %v419, 1.442695
        %v422 = vpow.pop %v421
        %v423 = vmul.f32 %v420, 1.442695
        %v424 = vpow.pop %v423
        %425 = vadd.xlane.f32.xlu0 %v422
        %v426 = vpop.xlane.xlu0 %425
        %427 = vadd.xlane.f32.xlu0 %v424
        %v428 = vpop.xlane.xlu0 %427
        %v429 = vlog2.pop %v426
        %v430 = vmul.f32 %v429, 0.6931472
        %v431 = vlog2.pop %v428
        %v432 = vmul.f32 %v431, 0.6931472
        %v433 = vadd.f32 %v416, %v430
        %v434 = vadd.f32 %v418, %v432
        %v435 = vsub.f32 %v247, %v433
        %v436 = vsub.f32 %v248, %v434
        %438 = vset.pattern.permute.xlu0 0
        %439 = vperm.xlu0 %438, %v435
        %v440 = vpop.permute.xlu0 %439
        %443 = vset.pattern.permute.xlu0 0
        %444 = vperm.xlu0 %443, %v436
        %v445 = vpop.permute.xlu0 %444
        %v447 = vadd.f32 %v244, %v440
        %v448 = vadd.f32 %v245, %v445
        %v449 = vmax.f32 %v447, %v448
        %v450 = vrot.slane %v449, 4
        %v451 = vmax.f32 %v449, %v450
        %v452 = vrot.slane %v451, 2
        %v453 = vmax.f32 %v451, %v452
        %v454 = vrot.slane %v453, 1
        %v455 = vmax.f32 %v453, %v454
        %v456 = vsub.f32 %v447, %v455
        %v457 = vsub.f32 %v448, %v455
        %v458 = vmul.f32 %v456, 1.442695
        %v459 = vpow.pop %v458
        %v460 = vmul.f32 %v457, 1.442695
        %v461 = vpow.pop %v460
        %v462 = vadd.f32 %v459, %v461
        %v463 = vrot.slane %v462, 4
        %v464 = vadd.f32 %v462, %v463
        %v465 = vrot.slane %v464, 2
        %v466 = vadd.f32 %v464, %v465
        %v467 = vrot.slane %v466, 1
        %v468 = vadd.f32 %v466, %v467
        %v469 = vlog2.pop %v468
        %v470 = vmul.f32 %v469, 0.6931472
        %v471 = vadd.f32 %v455, %v470
        %v472 = vsub.f32 %v246, %v471
        %v474 = vlaneseq
        %v475 = vshrl.u32 %v474, 7
        %v476 = vsub.s32 0, %v475
        %v477 = vrot.slane %v472, %v476
        %v479 = vadd.f32 %v244, %v477
        %v480 = vadd.f32 %v245, %v477
        %481 = vmax.xlane.f32.xlu0 %v479
        %v482 = vpop.xlane.xlu0 %481
        %483 = vmax.xlane.f32.xlu0 %v480
        %v484 = vpop.xlane.xlu0 %483
        %v485 = vsub.f32 %v479, %v482
        %v486 = vsub.f32 %v480, %v484
        %v487 = vmul.f32 %v485, 1.442695
        %v488 = vpow.pop %v487
        %v489 = vmul.f32 %v486, 1.442695
        %v490 = vpow.pop %v489
        %491 = vadd.xlane.f32.xlu0 %v488
        %v492 = vpop.xlane.xlu0 %491
        %493 = vadd.xlane.f32.xlu0 %v490
        %v494 = vpop.xlane.xlu0 %493
        %v495 = vlog2.pop %v492
        %v496 = vmul.f32 %v495, 0.6931472
        %v497 = vlog2.pop %v494
        %v498 = vmul.f32 %v497, 0.6931472
        %v499 = vadd.f32 %v482, %v496
        %v500 = vadd.f32 %v484, %v498
        %v501 = vsub.f32 %v247, %v499
        %v502 = vsub.f32 %v248, %v500
        %504 = vset.pattern.permute.xlu0 0
        %505 = vperm.xlu0 %504, %v501
        %v506 = vpop.permute.xlu0 %505
        %509 = vset.pattern.permute.xlu0 0
        %510 = vperm.xlu0 %509, %v502
        %v511 = vpop.permute.xlu0 %510
        %v513 = vadd.f32 %v244, %v506
        %v514 = vadd.f32 %v245, %v511
        %v515 = vmax.f32 %v513, %v514
        %v516 = vrot.slane %v515, 4
        %v517 = vmax.f32 %v515, %v516
        %v518 = vrot.slane %v517, 2
        %v519 = vmax.f32 %v517, %v518
        %v520 = vrot.slane %v519, 1
        %v521 = vmax.f32 %v519, %v520
        %v522 = vsub.f32 %v513, %v521
        %v523 = vsub.f32 %v514, %v521
        %v524 = vmul.f32 %v522, 1.442695
        %v525 = vpow.pop %v524
        %v526 = vmul.f32 %v523, 1.442695
        %v527 = vpow.pop %v526
        %v528 = vadd.f32 %v525, %v527
        %v529 = vrot.slane %v528, 4
        %v530 = vadd.f32 %v528, %v529
        %v531 = vrot.slane %v530, 2
        %v532 = vadd.f32 %v530, %v531
        %v533 = vrot.slane %v532, 1
        %v534 = vadd.f32 %v532, %v533
        %v535 = vlog2.pop %v534
        %v536 = vmul.f32 %v535, 0.6931472
        %v537 = vadd.f32 %v521, %v536
        %v538 = vsub.f32 %v246, %v537
        %v540 = vlaneseq
        %v541 = vshrl.u32 %v540, 7
        %v542 = vsub.s32 0, %v541
        %v543 = vrot.slane %v538, %v542
        %v545 = vadd.f32 %v244, %v543
        %v546 = vadd.f32 %v245, %v543
        %547 = vmax.xlane.f32.xlu0 %v545
        %v548 = vpop.xlane.xlu0 %547
        %549 = vmax.xlane.f32.xlu0 %v546
        %v550 = vpop.xlane.xlu0 %549
        %v551 = vsub.f32 %v545, %v548
        %v552 = vsub.f32 %v546, %v550
        %v553 = vmul.f32 %v551, 1.442695
        %v554 = vpow.pop %v553
        %v555 = vmul.f32 %v552, 1.442695
        %v556 = vpow.pop %v555
        %557 = vadd.xlane.f32.xlu0 %v554
        %v558 = vpop.xlane.xlu0 %557
        %559 = vadd.xlane.f32.xlu0 %v556
        %v560 = vpop.xlane.xlu0 %559
        %v561 = vlog2.pop %v558
        %v562 = vmul.f32 %v561, 0.6931472
        %v563 = vlog2.pop %v560
        %v564 = vmul.f32 %v563, 0.6931472
        %v565 = vadd.f32 %v548, %v562
        %v566 = vadd.f32 %v550, %v564
        %v567 = vsub.f32 %v247, %v565
        %v568 = vsub.f32 %v248, %v566
        %570 = vset.pattern.permute.xlu0 0
        %571 = vperm.xlu0 %570, %v567
        %v572 = vpop.permute.xlu0 %571
        %575 = vset.pattern.permute.xlu0 0
        %576 = vperm.xlu0 %575, %v568
        %v577 = vpop.permute.xlu0 %576
        %v579 = vadd.f32 %v244, %v572
        %v580 = vadd.f32 %v245, %v577
        %v581 = vmax.f32 %v579, %v580
        %v582 = vrot.slane %v581, 4
        %v583 = vmax.f32 %v581, %v582
        %v584 = vrot.slane %v583, 2
        %v585 = vmax.f32 %v583, %v584
        %v586 = vrot.slane %v585, 1
        %v587 = vmax.f32 %v585, %v586
        %v588 = vsub.f32 %v579, %v587
        %v589 = vsub.f32 %v580, %v587
        %v590 = vmul.f32 %v588, 1.442695
        %v591 = vpow.pop %v590
        %v592 = vmul.f32 %v589, 1.442695
        %v593 = vpow.pop %v592
        %v594 = vadd.f32 %v591, %v593
        %v595 = vrot.slane %v594, 4
        %v596 = vadd.f32 %v594, %v595
        %v597 = vrot.slane %v596, 2
        %v598 = vadd.f32 %v596, %v597
        %v599 = vrot.slane %v598, 1
        %v600 = vadd.f32 %v598, %v599
        %v601 = vlog2.pop %v600
        %v602 = vmul.f32 %v601, 0.6931472
        %v603 = vadd.f32 %v587, %v602
        %v604 = vsub.f32 %v246, %v603
        %v606 = vlaneseq
        %v607 = vshrl.u32 %v606, 7
        %v608 = vsub.s32 0, %v607
        %v609 = vrot.slane %v604, %v608
        %v611 = vadd.f32 %v244, %v609
        %v612 = vadd.f32 %v245, %v609
        %613 = vmax.xlane.f32.xlu0 %v611
        %v614 = vpop.xlane.xlu0 %613
        %615 = vmax.xlane.f32.xlu0 %v612
        %v616 = vpop.xlane.xlu0 %615
        %v617 = vsub.f32 %v611, %v614
        %v618 = vsub.f32 %v612, %v616
        %v619 = vmul.f32 %v617, 1.442695
        %v620 = vpow.pop %v619
        %v621 = vmul.f32 %v618, 1.442695
        %v622 = vpow.pop %v621
        %623 = vadd.xlane.f32.xlu0 %v620
        %v624 = vpop.xlane.xlu0 %623
        %625 = vadd.xlane.f32.xlu0 %v622
        %v626 = vpop.xlane.xlu0 %625
        %v627 = vlog2.pop %v624
        %v628 = vmul.f32 %v627, 0.6931472
        %v629 = vlog2.pop %v626
        %v630 = vmul.f32 %v629, 0.6931472
        %v631 = vadd.f32 %v614, %v628
        %v632 = vadd.f32 %v616, %v630
        %v633 = vsub.f32 %v247, %v631
        %v634 = vsub.f32 %v248, %v632
        %636 = vset.pattern.permute.xlu0 0
        %637 = vperm.xlu0 %636, %v633
        %v638 = vpop.permute.xlu0 %637
        %641 = vset.pattern.permute.xlu0 0
        %642 = vperm.xlu0 %641, %v634
        %v643 = vpop.permute.xlu0 %642
        %v645 = vadd.f32 %v244, %v638
        %v646 = vadd.f32 %v245, %v643
        %v647 = vmax.f32 %v645, %v646
        %v648 = vrot.slane %v647, 4
        %v649 = vmax.f32 %v647, %v648
        %v650 = vrot.slane %v649, 2
        %v651 = vmax.f32 %v649, %v650
        %v652 = vrot.slane %v651, 1
        %v653 = vmax.f32 %v651, %v652
        %v654 = vsub.f32 %v645, %v653
        %v655 = vsub.f32 %v646, %v653
        %v656 = vmul.f32 %v654, 1.442695
        %v657 = vpow.pop %v656
        %v658 = vmul.f32 %v655, 1.442695
        %v659 = vpow.pop %v658
        %v660 = vadd.f32 %v657, %v659
        %v661 = vrot.slane %v660, 4
        %v662 = vadd.f32 %v660, %v661
        %v663 = vrot.slane %v662, 2
        %v664 = vadd.f32 %v662, %v663
        %v665 = vrot.slane %v664, 1
        %v666 = vadd.f32 %v664, %v665
        %v667 = vlog2.pop %v666
        %v668 = vmul.f32 %v667, 0.6931472
        %v669 = vadd.f32 %v653, %v668
        %v670 = vsub.f32 %v246, %v669
        %v672 = vlaneseq
        %v673 = vshrl.u32 %v672, 7
        %v674 = vsub.s32 0, %v673
        %v675 = vrot.slane %v670, %v674
        %v677 = vadd.f32 %v244, %v675
        %v678 = vadd.f32 %v245, %v675
        %679 = vmax.xlane.f32.xlu0 %v677
        %v680 = vpop.xlane.xlu0 %679
        %681 = vmax.xlane.f32.xlu0 %v678
        %v682 = vpop.xlane.xlu0 %681
        %v683 = vsub.f32 %v677, %v680
        %v684 = vsub.f32 %v678, %v682
        %v685 = vmul.f32 %v683, 1.442695
        %v686 = vpow.pop %v685
        %v687 = vmul.f32 %v684, 1.442695
        %v688 = vpow.pop %v687
        %689 = vadd.xlane.f32.xlu0 %v686
        %v690 = vpop.xlane.xlu0 %689
        %691 = vadd.xlane.f32.xlu0 %v688
        %v692 = vpop.xlane.xlu0 %691
        %v693 = vlog2.pop %v690
        %v694 = vmul.f32 %v693, 0.6931472
        %v695 = vlog2.pop %v692
        %v696 = vmul.f32 %v695, 0.6931472
        %v697 = vadd.f32 %v680, %v694
        %v698 = vadd.f32 %v682, %v696
        %v699 = vsub.f32 %v247, %v697
        %v700 = vsub.f32 %v248, %v698
        %702 = vset.pattern.permute.xlu0 0
        %703 = vperm.xlu0 %702, %v699
        %v704 = vpop.permute.xlu0 %703
        %707 = vset.pattern.permute.xlu0 0
        %708 = vperm.xlu0 %707, %v700
        %v709 = vpop.permute.xlu0 %708
        %v711 = vadd.f32 %v244, %v704
        %v712 = vadd.f32 %v245, %v709
        %v713 = vmax.f32 %v711, %v712
        %v714 = vrot.slane %v713, 4
        %v715 = vmax.f32 %v713, %v714
        %v716 = vrot.slane %v715, 2
        %v717 = vmax.f32 %v715, %v716
        %v718 = vrot.slane %v717, 1
        %v719 = vmax.f32 %v717, %v718
        %v720 = vsub.f32 %v711, %v719
        %v721 = vsub.f32 %v712, %v719
        %v722 = vmul.f32 %v720, 1.442695
        %v723 = vpow.pop %v722
        %v724 = vmul.f32 %v721, 1.442695
        %v725 = vpow.pop %v724
        %v726 = vadd.f32 %v723, %v725
        %v727 = vrot.slane %v726, 4
        %v728 = vadd.f32 %v726, %v727
        %v729 = vrot.slane %v728, 2
        %v730 = vadd.f32 %v728, %v729
        %v731 = vrot.slane %v730, 1
        %v732 = vadd.f32 %v730, %v731
        %v733 = vlog2.pop %v732
        %v734 = vmul.f32 %v733, 0.6931472
        %v735 = vadd.f32 %v719, %v734
        %v736 = vsub.f32 %v246, %v735
        %v738 = vlaneseq
        %v739 = vshrl.u32 %v738, 7
        %v740 = vsub.s32 0, %v739
        %v741 = vrot.slane %v736, %v740
        %v743 = vadd.f32 %v244, %v741
        %v744 = vadd.f32 %v245, %v741
        %745 = vmax.xlane.f32.xlu0 %v743
        %v746 = vpop.xlane.xlu0 %745
        %747 = vmax.xlane.f32.xlu0 %v744
        %v748 = vpop.xlane.xlu0 %747
        %v749 = vsub.f32 %v743, %v746
        %v750 = vsub.f32 %v744, %v748
        %v751 = vmul.f32 %v749, 1.442695
        %v752 = vpow.pop %v751
        %v753 = vmul.f32 %v750, 1.442695
        %v754 = vpow.pop %v753
        %755 = vadd.xlane.f32.xlu0 %v752
        %v756 = vpop.xlane.xlu0 %755
        %757 = vadd.xlane.f32.xlu0 %v754
        %v758 = vpop.xlane.xlu0 %757
        %v759 = vlog2.pop %v756
        %v760 = vmul.f32 %v759, 0.6931472
        %v761 = vlog2.pop %v758
        %v762 = vmul.f32 %v761, 0.6931472
        %v763 = vadd.f32 %v746, %v760
        %v764 = vadd.f32 %v748, %v762
        %v765 = vsub.f32 %v247, %v763
        %v766 = vsub.f32 %v248, %v764
        %768 = vset.pattern.permute.xlu0 0
        %769 = vperm.xlu0 %768, %v765
        %v770 = vpop.permute.xlu0 %769
        %773 = vset.pattern.permute.xlu0 0
        %774 = vperm.xlu0 %773, %v766
        %v775 = vpop.permute.xlu0 %774
        %v777 = vadd.f32 %v244, %v770
        %v778 = vadd.f32 %v245, %v775
        %v779 = vmax.f32 %v777, %v778
        %v780 = vrot.slane %v779, 4
        %v781 = vmax.f32 %v779, %v780
        %v782 = vrot.slane %v781, 2
        %v783 = vmax.f32 %v781, %v782
        %v784 = vrot.slane %v783, 1
        %v785 = vmax.f32 %v783, %v784
        %v786 = vsub.f32 %v777, %v785
        %v787 = vsub.f32 %v778, %v785
        %v788 = vmul.f32 %v786, 1.442695
        %v789 = vpow.pop %v788
        %v790 = vmul.f32 %v787, 1.442695
        %v791 = vpow.pop %v790
        %v792 = vadd.f32 %v789, %v791
        %v793 = vrot.slane %v792, 4
        %v794 = vadd.f32 %v792, %v793
        %v795 = vrot.slane %v794, 2
        %v796 = vadd.f32 %v794, %v795
        %v797 = vrot.slane %v796, 1
        %v798 = vadd.f32 %v796, %v797
        %v799 = vlog2.pop %v798
        %v800 = vmul.f32 %v799, 0.6931472
        %v801 = vadd.f32 %v785, %v800
        %v802 = vsub.f32 %v246, %v801
        %v804 = vlaneseq
        %v805 = vshrl.u32 %v804, 7
        %v806 = vsub.s32 0, %v805
        %v807 = vrot.slane %v802, %v806
        %v809 = vadd.f32 %v244, %v807
        %v810 = vadd.f32 %v245, %v807
        %811 = vmax.xlane.f32.xlu0 %v809
        %v812 = vpop.xlane.xlu0 %811
        %813 = vmax.xlane.f32.xlu0 %v810
        %v814 = vpop.xlane.xlu0 %813
        %v815 = vsub.f32 %v809, %v812
        %v816 = vsub.f32 %v810, %v814
        %v817 = vmul.f32 %v815, 1.442695
        %v818 = vpow.pop %v817
        %v819 = vmul.f32 %v816, 1.442695
        %v820 = vpow.pop %v819
        %821 = vadd.xlane.f32.xlu0 %v818
        %v822 = vpop.xlane.xlu0 %821
        %823 = vadd.xlane.f32.xlu0 %v820
        %v824 = vpop.xlane.xlu0 %823
        %v825 = vlog2.pop %v822
        %v826 = vmul.f32 %v825, 0.6931472
        %v827 = vlog2.pop %v824
        %v828 = vmul.f32 %v827, 0.6931472
        %v829 = vadd.f32 %v812, %v826
        %v830 = vadd.f32 %v814, %v828
        %v831 = vsub.f32 %v247, %v829
        %v832 = vsub.f32 %v248, %v830
        %834 = vset.pattern.permute.xlu0 0
        %835 = vperm.xlu0 %834, %v831
        %v836 = vpop.permute.xlu0 %835
        %839 = vset.pattern.permute.xlu0 0
        %840 = vperm.xlu0 %839, %v832
        %v841 = vpop.permute.xlu0 %840
        %v843 = vadd.f32 %v244, %v836
        %v844 = vadd.f32 %v245, %v841
        %v845 = vmax.f32 %v843, %v844
        %v846 = vrot.slane %v845, 4
        %v847 = vmax.f32 %v845, %v846
        %v848 = vrot.slane %v847, 2
        %v849 = vmax.f32 %v847, %v848
        %v850 = vrot.slane %v849, 1
        %v851 = vmax.f32 %v849, %v850
        %v852 = vsub.f32 %v843, %v851
        %v853 = vsub.f32 %v844, %v851
        %v854 = vmul.f32 %v852, 1.442695
        %v855 = vpow.pop %v854
        %v856 = vmul.f32 %v853, 1.442695
        %v857 = vpow.pop %v856
        %v858 = vadd.f32 %v855, %v857
        %v859 = vrot.slane %v858, 4
        %v860 = vadd.f32 %v858, %v859
        %v861 = vrot.slane %v860, 2
        %v862 = vadd.f32 %v860, %v861
        %v863 = vrot.slane %v862, 1
        %v864 = vadd.f32 %v862, %v863
        %v865 = vlog2.pop %v864
        %v866 = vmul.f32 %v865, 0.6931472
        %v867 = vadd.f32 %v851, %v866
        %v868 = vsub.f32 %v246, %v867
        %v870 = vlaneseq
        %v871 = vshrl.u32 %v870, 7
        %v872 = vsub.s32 0, %v871
        %v873 = vrot.slane %v868, %v872
        %v875 = vadd.f32 %v244, %v873
        %v876 = vadd.f32 %v245, %v873
        %877 = vmax.xlane.f32.xlu0 %v875
        %v878 = vpop.xlane.xlu0 %877
        %879 = vmax.xlane.f32.xlu0 %v876
        %v880 = vpop.xlane.xlu0 %879
        %v881 = vsub.f32 %v875, %v878
        %v882 = vsub.f32 %v876, %v880
        %v883 = vmul.f32 %v881, 1.442695
        %v884 = vpow.pop %v883
        %v885 = vmul.f32 %v882, 1.442695
        %v886 = vpow.pop %v885
        %887 = vadd.xlane.f32.xlu0 %v884
        %v888 = vpop.xlane.xlu0 %887
        %889 = vadd.xlane.f32.xlu0 %v886
        %v890 = vpop.xlane.xlu0 %889
        %v891 = vlog2.pop %v888
        %v892 = vmul.f32 %v891, 0.6931472
        %v893 = vlog2.pop %v890
        %v894 = vmul.f32 %v893, 0.6931472
        %v895 = vadd.f32 %v878, %v892
        %v896 = vadd.f32 %v880, %v894
        %v897 = vsub.f32 %v247, %v895
        %v898 = vsub.f32 %v248, %v896
        %900 = vset.pattern.permute.xlu0 0
        %901 = vperm.xlu0 %900, %v897
        %v902 = vpop.permute.xlu0 %901
        %905 = vset.pattern.permute.xlu0 0
        %906 = vperm.xlu0 %905, %v898
        %v907 = vpop.permute.xlu0 %906
        %v909 = vadd.f32 %v875, %v902
        %v910 = vadd.f32 %v876, %v907
        %v911 = vld [vmem:[%s243] sm:$0x1]
        %v913 = vlaneseq
        %v914 = vshrl.u32 %v913, 7
        %v915 = vsub.s32 0, %v914
        %v916 = vrot.slane %v911, %v915
        %917 = vset.pattern.permute.xlu0 0
        %918 = vperm.xlu0 %917, %v916
        %v919 = vpop.permute.xlu0 %918
        %v921 = vsub.f32 %v909, %v919
        %v922 = vsub.f32 %v910, %v919
        %923 = vst [vmem:[%s227] sm:$0xff] %v921
        %924 = vst [vmem:[%s227 + $0x8] sm:$0xff] %v922
        %s925 = sand.u32 %s130, 1
        %s926 = scalar_lea.sflag [#allocation3], %s925
        %s927 = sand.u32 %s130, 1
        %s928 = smul.addr %s927, 16
        %s929 = scalar_lea.vmem [#allocation2], %s928
        // Predicated region
        $region37: #{tpu_custom_call.1} parent=35 // pred_check
          %p930 = pneg %p140
        $region38: #{tpu_custom_call.1} parent=35 // pred_check_branch
          %932 = sbr.rel (%p930) target = $region40
        $region39: #{tpu_custom_call.1} parent=35 // pred_region
          %s934 = ssub.s32 256, 256
          %935 = vsyncadd %s926, %s934
          %s936 = smul.addr %s18, 2
          %s937 = smul.addr %s936, 128
          %s938 = scalar_lea.hbm %s4, %s937
          %s939 = sshll.u32 %s929, 4
          %s940 = int_to_ptr.vmem [resolvable:$true] %s939
          %945 = dma.vmem_to_hbm [thread:$0]  %s940, 256, %s938, %s926, 128, 128, 8
        $region40: #{tpu_custom_call.1} parent=35 // pred_fallthru
          _
      $region36: #{tpu_custom_call.1} parent=5 // pred_fallthru
        _
      %p946 = scmp.le.s32.totalorder 2, %s13
      // Predicated region
      $region41: #{tpu_custom_call.1} parent=5 // pred_check
        %p947 = pneg %p946
      $region42: #{tpu_custom_call.1} parent=5 // pred_check_branch
        %949 = sbr.rel (%p947) target = $region44
      $region43: #{tpu_custom_call.1} parent=5 // pred_region
        %s950 = ssub.s32 %s13, 2
        // Predicated region
        $region45: #{tpu_custom_call.1} parent=43 // pred_check
          %p951 = pneg %p146
        $region46: #{tpu_custom_call.1} parent=43 // pred_check_branch
          %953 = sbr.rel (%p951) target = $region48
        $region47: #{tpu_custom_call.1} parent=43 // pred_region
          %s954 = sand.u32 %s131, 1
          %s955 = scalar_lea.sflag [#allocation3], %s954
          %s956 = sand.u32 %s131, 1
          %s957 = smul.addr %s956, 16
          %s958 = scalar_lea.vmem [#allocation2], %s957
          %959 = dma.done %s955, 256
        $region48: #{tpu_custom_call.1} parent=43 // pred_fallthru
          _
      $region44: #{tpu_custom_call.1} parent=5 // pred_fallthru
        _
    $region6: #{tpu_custom_call.1} parent=1 // loop_footer
      %s17 = sadd.s32 1, %s13
    $region7: #{tpu_custom_call.1} parent=1 // loop_footer_branch
      %12 = sbr.rel target = $region3
    $region8: #{tpu_custom_call.1} parent=1 // loop_exit
      _
    %960 = vsyncpa [#allocation3], 1
    %s961 = scalar_lea.sflag [#allocation3], 1
    %962 = vsyncpa %s961, 1

</llo_original>
